<compile_context>
chip_gen: v6e
topology: v6e:2x2x1
jax: 0.10.0
libtpu: 0.0.40
codegen_flags: <defaults>
</compile_context>

<pallas_src>
import jax
import jax.numpy as jnp
from jax.experimental import pallas as pl
from jax.experimental.pallas import tpu as pltpu


def _copy_kernel(x_ref, o_ref):
    # Whole-tile, lane-dense copy; the (N, 1) view is metadata in the wrapper.
    o_ref[...] = x_ref[...]


def unflatten_forward(inp):
    """UnFlatten.forward: returns inp.view(inp.size(0), 1).

    Same contract as torch's .view(N, 1): the input must contain exactly
    N = inp.shape[0] elements, otherwise we raise (torch would error too).
    """
    N = inp.shape[0]
    total = 1
    for d in inp.shape:
        total *= d
    if total != N:
        raise ValueError(f"cannot view tensor of shape {inp.shape} as ({N}, 1)")

    flat = inp.reshape(-1)  # metadata-only flatten

    # Lane-dense 2-D presentation, with NO padding and NO slicing:
    #   - if N divides a 128-multiple lane width, use a dense (rows, lane) slab
    #     (full vregs on every vld/vst, 8x less VMEM than a (1, N) row),
    #   - otherwise fall back to a single (1, N) full-array block (full-dim
    #     blocks are exempt from the (8,128) divisibility rule; fine for the
    #     small batch sizes this module sees).
    lane = N
    rows = 1
    for cand in (1024, 512, 256, 128):
        if N % cand == 0:
            lane = cand
            rows = N // cand
            break
    x2d = flat.reshape(rows, lane)

    # Row tiling: aim for ~2 MiB blocks (amortizes the ~0.35 us per-grid-step
    # overhead and keeps (in + out) double buffers far below the scoped-VMEM
    # defaults on every chip, including v7x's 64 MiB VMEM).  Only tile when
    # the tile divides rows exactly; otherwise use the full array as one block.
    itemsize = jnp.dtype(inp.dtype).itemsize
    target_rows = max(8, (2 * 1024 * 1024) // (lane * itemsize))
    tile_rows = rows
    if lane % 128 == 0:
        for cand in (1024, 512, 256, 128, 64, 32, 16, 8):
            if cand <= rows and cand <= target_rows and rows % cand == 0:
                tile_rows = cand
                break

    grid = (rows // tile_rows,)

    out2d = pl.pallas_call(
        _copy_kernel,
        out_shape=jax.ShapeDtypeStruct((rows, lane), inp.dtype),
        grid=grid,
        in_specs=[pl.BlockSpec((tile_rows, lane), lambda i: (i, 0))],
        out_specs=pl.BlockSpec((tile_rows, lane), lambda i: (i, 0)),
        # Output aliases the input buffer: under jit with donation this is an
        # in-place pass-through; eagerly it is still a correct plain copy.
        input_output_aliases={0: 0},
        compiler_params=pltpu.CompilerParams(
            dimension_semantics=("parallel",)),
    )(x2d)

    return out2d.reshape(N, 1)  # metadata-only


if __name__ == "__main__":
    key = jax.random.PRNGKey(0)

    # Small shape the forward implies: the input must have exactly N elements,
    # e.g. (N, 1, 1, 1) coming out of a squeezed conv head, or a plain (N,).
    N = 2
    x = jax.random.normal(key, (N, 1, 1, 1), jnp.float32)
    ref = jnp.reshape(x, (N, 1))
    out = jax.block_until_ready(unflatten_forward(x))
    assert out.shape == (N, 1), out.shape
    assert out.dtype == x.dtype, out.dtype
    assert jnp.array_equal(out, ref)

    # 1-D input (the other shape this forward admits).
    x2 = jax.random.normal(jax.random.PRNGKey(0), (8,), jnp.float32)
    out2 = jax.block_until_ready(unflatten_forward(x2))
    assert out2.shape == (8, 1), out2.shape
    assert jnp.array_equal(out2, x2.reshape(8, 1))

    # Larger batch exercising the lane-dense slab path (and bf16).
    N3 = 8192
    x3 = jax.random.normal(jax.random.PRNGKey(0), (N3, 1), jnp.bfloat16)
    out3 = jax.block_until_ready(unflatten_forward(x3))
    assert out3.shape == (N3, 1), out3.shape
    assert jnp.array_equal(out3, x3.reshape(N3, 1))

    print("KERNEL_OK")
</pallas_src>

<mosaic_0001>
module attributes {stable_mosaic.version = 11 : i64} {
  func.func @_copy_kernel(%arg0: i32, %arg1: memref<1x2xf32, #tpu.memory_space<vmem>>, %arg2: memref<1x2xf32, #tpu.memory_space<vmem>>) attributes {dimension_semantics = [#tpu.dimension_semantics<parallel>], iteration_bounds = array<i64: 1>, scalar_prefetch = 0 : i64, scratch_operands = 0 : i64, tpu.core_type = #tpu.core_type<tc>, window_params = [{transform_indices = @transform_0, window_bounds = array<i64: 1, 2>}, {transform_indices = @transform_1, window_bounds = array<i64: 1, 2>}]} {
    %c0 = arith.constant 0 : index
    %c0_0 = arith.constant 0 : index
    %0 = vector.load %arg1[%c0, %c0_0] : memref<1x2xf32, #tpu.memory_space<vmem>>, vector<1x2xf32>
    %c0_1 = arith.constant 0 : index
    %c0_2 = arith.constant 0 : index
    %1 = vector.load %arg2[%c0_1, %c0_2] : memref<1x2xf32, #tpu.memory_space<vmem>>, vector<1x2xf32>
    tpu.vector_store %arg2[%c0_1, %c0_2], %0 {strides = array<i32>} : memref<1x2xf32, #tpu.memory_space<vmem>>, vector<1x2xf32>,
    return
  }
  func.func @transform_0(%arg0: i32) -> (i32, i32) {
    %c0_i32 = arith.constant 0 : i32
    %c0_i32_0 = arith.constant 0 : i32
    return %arg0, %c0_i32 : i32, i32
  }
  func.func @transform_1(%arg0: i32) -> (i32, i32) {
    %c0_i32 = arith.constant 0 : i32
    %c0_i32_0 = arith.constant 0 : i32
    return %arg0, %c0_i32 : i32, i32
  }
}

</mosaic_0001>

<llo_original>
// kernel: tpu_custom_call.1
$region0: #{tpu_custom_call.1}
  #allocation0 [shape = 'u32[]', space=smem, size = 0x4, offset = 0x4, fixed_abs, tag = 'smem constant byte address 0x4 - core index']
  #allocation1 [shape = 'u32[144,128]{1,0:T(1,128)}', space=vmem, size = 0x12000, scoped, tag = 'internal scratch']
  %s0 = inlined_call_operand.hbm [shape: f32[1,2], index: 0, kind: input, shape index: {}, may-alias: {0,1}]
  %s1 = inlined_call_operand.hbm [shape: f32[1,2], index: 1, kind: output, shape index: {}, may-alias: {0,1}]
  %s2 = sld [smem:[#allocation0]]
  $region18: #{tpu_custom_call.1} parent=0
    _
  %s4 = ssub.s32 1, %s2
  %s5 = scalar_select 0, %s4, %s2
  $region1: #{tpu_custom_call.1} parent=0
    #allocation2 [shape = 'u8[512]{0}', space=vmem, size = 0x400, scoped, tag = 'input window, operand 0, single buffered']
    #allocation3 [shape = 's32[1]{0}', space=sflag, size = 0x4, scoped, tag = 'scoped memory for tpu_custom_call.1']
    #allocation4 [shape = 's32[1]{0}', space=sflag, size = 0x4, scoped, tag = 'scoped memory for tpu_custom_call.1']
    #allocation5 [shape = 'u8[512]{0}', space=vmem, size = 0x400, scoped, tag = 'output window, operand 0, single buffered']
    %6 = vsyncpa [#allocation3], 0
    %7 = vsyncpa [#allocation4], 0
    // Predicated region
    $region2: #{tpu_custom_call.1} parent=1 // pred_check
      _
    $region3: #{tpu_custom_call.1} parent=1 // pred_check_branch
      %9 = sbr.rel (0) target = $region5
    $region4: #{tpu_custom_call.1} parent=1 // pred_region
      %s11 = ssub.s32 16, 16
      %12 = vsyncadd [#allocation3], %s11
      %s14 = sshll.u32 [#allocation2], 4
      %s15 = int_to_ptr.vmem [resolvable:$true] %s14
      %17 = dma.hbm_to_vmem [thread:$0]  %s0, 16, %s15, [#allocation3]
    $region5: #{tpu_custom_call.1} parent=1 // pred_fallthru
      _
    // Predicated region
    $region6: #{tpu_custom_call.1} parent=1 // pred_check
      _
    $region7: #{tpu_custom_call.1} parent=1 // pred_check_branch
      %19 = sbr.rel (0) target = $region9
    $region8: #{tpu_custom_call.1} parent=1 // pred_region
      %20 = dma.done [#allocation3], 16
    $region9: #{tpu_custom_call.1} parent=1 // pred_fallthru
      _
    %v21 = vld [vmem:[#allocation2] sm:$0x1]
    %vm22 = vcmask 8192
    %23 = vst.msk [vmem:[#allocation5] sm:$0x1] %vm22, %v21
    // Predicated region
    $region10: #{tpu_custom_call.1} parent=1 // pred_check
      _
    $region11: #{tpu_custom_call.1} parent=1 // pred_check_branch
      %25 = sbr.rel (0) target = $region13
    $region12: #{tpu_custom_call.1} parent=1 // pred_region
      %s27 = ssub.s32 16, 16
      %28 = vsyncadd [#allocation4], %s27
      %s30 = sshll.u32 [#allocation5], 4
      %s31 = int_to_ptr.vmem [resolvable:$true] %s30
      %33 = dma.vmem_to_hbm [thread:$0]  %s31, 16, %s1, [#allocation4]
    $region13: #{tpu_custom_call.1} parent=1 // pred_fallthru
      _
    // Predicated region
    $region14: #{tpu_custom_call.1} parent=1 // pred_check
      _
    $region15: #{tpu_custom_call.1} parent=1 // pred_check_branch
      %35 = sbr.rel (0) target = $region17
    $region16: #{tpu_custom_call.1} parent=1 // pred_region
      %36 = dma.done [#allocation4], 16
    $region17: #{tpu_custom_call.1} parent=1 // pred_fallthru
      _
    %37 = vsyncpa [#allocation3], 1
    %38 = vsyncpa [#allocation4], 1

</llo_original>
